<compile_context>
chip_gen: v5e
topology: v5e:2x2
jax: 0.10.0
libtpu: 0.0.40
codegen_flags: <defaults>
</compile_context>

<pallas_src>
import functools
import math

import jax
import jax.numpy as jnp
from jax.experimental import pallas as pl
from jax.experimental.pallas import tpu as pltpu

BLOCK_SIZE = 8
LANE = 128


def _round_up(x, m):
    return ((x + m - 1) // m) * m


# ----------------------------------------------------------------------------- kernels
def _forward_tiles(idx_col, emb, fcw, fcb, n, v_pad):
    """Shared body: (N, V_pad) one-hot gather + Linear, all in vregs / MXU."""
    lane = jax.lax.broadcasted_iota(jnp.int32, (n, v_pad), 1)          # (N, V_pad)
    one_hot = (lane == idx_col).astype(jnp.float32)                    # 1 VPU compare
    # Exact embedding gather: one-hot rows are bf16-exact, so the (>=3-pass) f32
    # MXU matmul reproduces emb rows exactly.
    tok_emb = jnp.dot(one_hot, emb, preferred_element_type=jnp.float32)      # (N, E)
    logits = jnp.dot(tok_emb, fcw, preferred_element_type=jnp.float32) + fcb  # (N, V_pad)
    return lane, logits


def bigram_logits_kernel(idx_ref, emb_ref, fcw_ref, fcb_ref, logits_ref):
    n, v_pad = logits_ref.shape
    _, logits = _forward_tiles(idx_ref[...], emb_ref[...], fcw_ref[...],
                               fcb_ref[...], n, v_pad)
    logits_ref[...] = logits


def bigram_logits_loss_kernel(vocab, idx_ref, tgt_ref, emb_ref, fcw_ref, fcb_ref,
                              logits_ref, loss_ref):
    n, v_pad = logits_ref.shape
    lane, logits = _forward_tiles(idx_ref[...], emb_ref[...], fcw_ref[...],
                                  fcb_ref[...], n, v_pad)
    logits_ref[...] = logits

    # Mean cross-entropy while the tile is still in vregs (padded lanes -> -inf).
    masked = jnp.where(lane < vocab, logits, jnp.float32(-1e30))
    m = jnp.max(masked, axis=-1, keepdims=True)
    lse = jnp.log(jnp.sum(jnp.exp(masked - m), axis=-1, keepdims=True)) + m    # (N, 1)
    picked = jnp.sum(jnp.where(lane == tgt_ref[...], logits, 0.0),
                     axis=-1, keepdims=True)                                   # (N, 1)
    loss_ref[0, 0] = jnp.mean(lse - picked)


def bigram_loss_kernel(vocab, idx_ref, tgt_ref, emb_ref, fcw_ref, fcb_ref, loss_ref):
    """Loss-only variant: no (N, V_pad) logits HBM write."""
    n = idx_ref.shape[0]
    v_pad = fcw_ref.shape[1]
    lane, logits = _forward_tiles(idx_ref[...], emb_ref[...], fcw_ref[...],
                                  fcb_ref[...], n, v_pad)
    masked = jnp.where(lane < vocab, logits, jnp.float32(-1e30))
    m = jnp.max(masked, axis=-1, keepdims=True)
    lse = jnp.log(jnp.sum(jnp.exp(masked - m), axis=-1, keepdims=True)) + m
    picked = jnp.sum(jnp.where(lane == tgt_ref[...], logits, 0.0),
                     axis=-1, keepdims=True)
    loss_ref[0, 0] = jnp.mean(lse - picked)


# ----------------------------------------------------------------------------- params
def init_params(vocab_size, emb_size, key):
    k1, k2, k3, k4 = jax.random.split(key, 4)
    bound = 1.0 / math.sqrt(emb_size)
    return {
        "token_emb": jax.random.normal(k1, (vocab_size, emb_size), jnp.float32),
        # unused in forward (kept for structural parity with the PyTorch module)
        "position_emb": jax.random.normal(k2, (BLOCK_SIZE, emb_size), jnp.float32),
        "fc_w": jax.random.uniform(k3, (emb_size, vocab_size), jnp.float32, -bound, bound),
        "fc_b": jax.random.uniform(k4, (1, vocab_size), jnp.float32, -bound, bound),
    }


def prepare_params(params):
    """One-time lane-dense padding of the weights (hoist out of the per-call loop)."""
    V, E = params["token_emb"].shape
    V_pad = _round_up(V, LANE)
    emb_pad = jnp.zeros((V_pad, E), jnp.float32).at[:V, :].set(params["token_emb"])
    fcw_pad = jnp.zeros((E, V_pad), jnp.float32).at[:, :V].set(params["fc_w"])
    fcb_pad = jnp.zeros((1, V_pad), jnp.float32).at[:, :V].set(params["fc_b"])
    return {"emb": emb_pad, "fcw": fcw_pad, "fcb": fcb_pad, "vocab": V}


# ----------------------------------------------------------------------------- wrappers
_VMEM = pl.BlockSpec(memory_space=pltpu.MemorySpace.VMEM)
_SMEM = pl.BlockSpec(memory_space=pltpu.MemorySpace.SMEM)


def bigram_forward_padded(prepared, idx, targets=None):
    """Lane-dense forward: returns ((N, V_pad) logits, loss|None). Padded cols are 0."""
    B, T = idx.shape
    N = B * T
    V = prepared["vocab"]
    V_pad = prepared["emb"].shape[0]
    idx_col = idx.reshape(N, 1).astype(jnp.int32)

    if targets is None:
        logits_pad = pl.pallas_call(
            bigram_logits_kernel,
            out_shape=jax.ShapeDtypeStruct((N, V_pad), jnp.float32),
            in_specs=[_VMEM, _VMEM, _VMEM, _VMEM],
            out_specs=_VMEM,
        )(idx_col, prepared["emb"], prepared["fcw"], prepared["fcb"])
        return logits_pad, None

    tgt_col = targets.reshape(N, 1).astype(jnp.int32)
    logits_pad, loss = pl.pallas_call(
        functools.partial(bigram_logits_loss_kernel, V),
        out_shape=(jax.ShapeDtypeStruct((N, V_pad), jnp.float32),
                   jax.ShapeDtypeStruct((1, 1), jnp.float32)),
        in_specs=[_VMEM, _VMEM, _VMEM, _VMEM, _VMEM],
        out_specs=(_VMEM, _SMEM),
    )(idx_col, tgt_col, prepared["emb"], prepared["fcw"], prepared["fcb"])
    return logits_pad, loss[0, 0]


def bigram_forward(prepared, idx, targets=None):
    """Module-parity API: (B, T, V) logits (or (B*T, V) with targets) + loss.

    The [:, :V] slice / reshape happens only here, at the API boundary; internal
    consumers (e.g. a generate loop) should use `bigram_forward_padded` directly.
    """
    B, T = idx.shape
    V = prepared["vocab"]
    logits_pad, loss = bigram_forward_padded(prepared, idx, targets)
    if targets is None:
        return logits_pad[:, :V].reshape(B, T, V), None
    return logits_pad[:, :V], loss


def bigram_loss(prepared, idx, targets):
    """Training-loss-only path: skips the logits HBM write entirely."""
    B, T = idx.shape
    N = B * T
    V = prepared["vocab"]
    idx_col = idx.reshape(N, 1).astype(jnp.int32)
    tgt_col = targets.reshape(N, 1).astype(jnp.int32)
    loss = pl.pallas_call(
        functools.partial(bigram_loss_kernel, V),
        out_shape=jax.ShapeDtypeStruct((1, 1), jnp.float32),
        in_specs=[_VMEM, _VMEM, _VMEM, _VMEM, _VMEM],
        out_specs=_SMEM,
    )(idx_col, tgt_col, prepared["emb"], prepared["fcw"], prepared["fcb"])
    return loss[0, 0]


# ----------------------------------------------------------------------------- reference
def bigram_forward_ref(params, idx, targets=None):
    """Pure-JAX reference mirroring the PyTorch forward."""
    B, T = idx.shape
    tok_emb = params["token_emb"][idx]                                   # (B, T, E)
    logits = jnp.matmul(tok_emb, params["fc_w"],
                        precision=jax.lax.Precision.HIGHEST) + params["fc_b"][0]
    if targets is None:
        return logits, None
    V = logits.shape[-1]
    flat = logits.reshape(B * T, V)
    tgt = targets.reshape(B * T)
    lse = jax.scipy.special.logsumexp(flat, axis=-1)
    picked = jnp.take_along_axis(flat, tgt[:, None], axis=-1)[:, 0]
    return flat, jnp.mean(lse - picked)


if __name__ == "__main__":
    vocab_size = 65   # typical len(set(text)) for the Shakespeare dataset
    emb_size = 32
    B, T = 2, BLOCK_SIZE

    key = jax.random.PRNGKey(0)
    pkey, ikey, tkey = jax.random.split(key, 3)
    params = init_params(vocab_size, emb_size, pkey)
    prepared = prepare_params(params)        # one-time; reuse across all forward calls

    idx = jax.random.randint(ikey, (B, T), 0, vocab_size, dtype=jnp.int32)
    targets = jax.random.randint(tkey, (B, T), 0, vocab_size, dtype=jnp.int32)

    # targets=None path: logits shape (B, T, V)
    logits_no_tgt, loss_none = bigram_forward(prepared, idx, None)
    logits_no_tgt = jax.block_until_ready(logits_no_tgt)

    # targets path: logits shape (B*T, V) plus scalar loss (single fused kernel)
    logits, loss = bigram_forward(prepared, idx, targets)
    logits = jax.block_until_ready(logits)
    loss = jax.block_until_ready(loss)

    # loss-only path (no logits HBM write)
    loss_only = jax.block_until_ready(bigram_loss(prepared, idx, targets))

    # correctness check against pure-JAX reference
    ref_logits_nt, _ = bigram_forward_ref(params, idx, None)
    ref_logits, ref_loss = bigram_forward_ref(params, idx, targets)
    assert logits_no_tgt.shape == (B, T, vocab_size)
    assert logits.shape == (B * T, vocab_size)
    assert loss_none is None
    assert jnp.allclose(logits_no_tgt, ref_logits_nt, atol=1e-5, rtol=1e-5)
    assert jnp.allclose(logits, ref_logits, atol=1e-5, rtol=1e-5)
    assert jnp.allclose(loss, ref_loss, atol=1e-5, rtol=1e-5)
    assert jnp.allclose(loss_only, ref_loss, atol=1e-5, rtol=1e-5)

    print("KERNEL_OK")
</pallas_src>

<mosaic_0001>
module attributes {stable_mosaic.version = 11 : i64} {
  func.func @bigram_logits_kernel(%arg0: memref<16x1xi32, #tpu.memory_space<vmem>>, %arg1: memref<128x32xf32, #tpu.memory_space<vmem>>, %arg2: memref<32x128xf32, #tpu.memory_space<vmem>>, %arg3: memref<1x128xf32, #tpu.memory_space<vmem>>, %arg4: memref<16x128xf32, #tpu.memory_space<vmem>>) attributes {dimension_semantics = [], scalar_prefetch = 0 : i64, scratch_operands = 0 : i64, tpu.core_type = #tpu.core_type<tc>} {
    %c0 = arith.constant 0 : index
    %c0_0 = arith.constant 0 : index
    %0 = vector.load %arg0[%c0, %c0_0] : memref<16x1xi32, #tpu.memory_space<vmem>>, vector<16x1xi32>
    %c0_1 = arith.constant 0 : index
    %c0_2 = arith.constant 0 : index
    %1 = vector.load %arg1[%c0_1, %c0_2] : memref<128x32xf32, #tpu.memory_space<vmem>>, vector<128x32xf32>
    %c0_3 = arith.constant 0 : index
    %c0_4 = arith.constant 0 : index
    %2 = vector.load %arg2[%c0_3, %c0_4] : memref<32x128xf32, #tpu.memory_space<vmem>>, vector<32x128xf32>
    %c0_5 = arith.constant 0 : index
    %c0_6 = arith.constant 0 : index
    %3 = vector.load %arg3[%c0_5, %c0_6] : memref<1x128xf32, #tpu.memory_space<vmem>>, vector<1x128xf32>
    %4 = tpu.iota {dimensions = array<i32: 1>} : vector<16x128xi32>
    %5 = vector.broadcast %0 : vector<16x1xi32> to vector<16x128xi32>
    %6 = arith.cmpi eq, %4, %5 : vector<16x128xi32>
    %7 = arith.extui %6 : vector<16x128xi1> to vector<16x128xi32>
    %8 = arith.sitofp %7 : vector<16x128xi32> to vector<16x128xf32>
    %cst = arith.constant dense<0.000000e+00> : vector<16x32xf32>
    %9 = tpu.matmul %8, %1, %cst {dimension_numbers = #tpu.dot_dimension_numbers<[1], [0], [0], [1], [0, 0, 1, 1], [], []>} : vector<16x128xf32>, vector<128x32xf32>, vector<16x32xf32> -> vector<16x32xf32>
    %cst_7 = arith.constant dense<0.000000e+00> : vector<16x128xf32>
    %10 = tpu.matmul %9, %2, %cst_7 {dimension_numbers = #tpu.dot_dimension_numbers<[1], [0], [0], [1], [0, 0, 1, 1], [], []>} : vector<16x32xf32>, vector<32x128xf32>, vector<16x128xf32> -> vector<16x128xf32>
    %11 = vector.broadcast %3 : vector<1x128xf32> to vector<16x128xf32>
    %12 = arith.addf %10, %11 : vector<16x128xf32>
    %c0_8 = arith.constant 0 : index
    %c0_9 = arith.constant 0 : index
    %13 = vector.load %arg4[%c0_8, %c0_9] : memref<16x128xf32, #tpu.memory_space<vmem>>, vector<16x128xf32>
    tpu.vector_store %arg4[%c0_8, %c0_9], %12 {strides = array<i32>} : memref<16x128xf32, #tpu.memory_space<vmem>>, vector<16x128xf32>,
    return
  }
}

</mosaic_0001>

<llo_original>
// kernel: tpu_custom_call.1
$region0: #{tpu_custom_call.1}
  #allocation0 [shape = 'u32[]', space=smem, size = 0x4, offset = 0x4, fixed_abs, tag = 'smem constant byte address 0x4 - core index']
  #allocation1 [shape = 'u32[72,128]{1,0:T(1,128)}', space=vmem, size = 0x9000, scoped, tag = 'internal scratch']
  %s0 = inlined_call_operand.vmem [shape: s32[16,1], index: 0, kind: input, shape index: {}]
  %s1 = inlined_call_operand.vmem [shape: f32[128,32], index: 1, kind: input, shape index: {}]
  %s2 = inlined_call_operand.vmem [shape: f32[32,128], index: 2, kind: input, shape index: {}]
  %s3 = inlined_call_operand.vmem [shape: f32[1,128], index: 3, kind: input, shape index: {}]
  %s4 = inlined_call_operand.hbm [shape: f32[16,128], index: 4, kind: output, shape index: {}]
  %s5 = sld [smem:[#allocation0]]
  $region26: #{tpu_custom_call.1} parent=0
    _
  %s7 = ssub.s32 1, %s5
  %s8 = scalar_select 0, %s7, %s5
  $region1: #{tpu_custom_call.1} parent=0
    #allocation2 [shape = 'u8[8192]{0}', space=vmem, size = 0x2000, scoped, tag = 'output window, operand 0, single buffered']
    #allocation3 [shape = 's32[1]{0}', space=sflag, size = 0x4, scoped, tag = 'scoped memory for tpu_custom_call.1']
    %9 = vsyncpa [#allocation3], 0
    // Predicated region
    $region2: #{tpu_custom_call.1} parent=1 // pred_check
      _
    $region3: #{tpu_custom_call.1} parent=1 // pred_check_branch
      %11 = sbr.rel (0) target = $region5
    $region4: #{tpu_custom_call.1} parent=1 // pred_region
      _
    $region5: #{tpu_custom_call.1} parent=1 // pred_fallthru
      _
    // Predicated region
    $region6: #{tpu_custom_call.1} parent=1 // pred_check
      _
    $region7: #{tpu_custom_call.1} parent=1 // pred_check_branch
      %13 = sbr.rel (0) target = $region9
    $region8: #{tpu_custom_call.1} parent=1 // pred_region
      _
    $region9: #{tpu_custom_call.1} parent=1 // pred_fallthru
      _
    // Predicated region
    $region10: #{tpu_custom_call.1} parent=1 // pred_check
      _
    $region11: #{tpu_custom_call.1} parent=1 // pred_check_branch
      %15 = sbr.rel (0) target = $region13
    $region12: #{tpu_custom_call.1} parent=1 // pred_region
      _
    $region13: #{tpu_custom_call.1} parent=1 // pred_fallthru
      _
    // Predicated region
    $region14: #{tpu_custom_call.1} parent=1 // pred_check
      _
    $region15: #{tpu_custom_call.1} parent=1 // pred_check_branch
      %17 = sbr.rel (0) target = $region17
    $region16: #{tpu_custom_call.1} parent=1 // pred_region
      _
    $region17: #{tpu_custom_call.1} parent=1 // pred_fallthru
      _
    %v18 = vld [vmem:[%s0] sm:$0xff]
    %v19 = vld [vmem:[%s0 + $0x8] sm:$0xff]
    %v20 = vld [vmem:[%s1] sm:$0xff]
    %v21 = vld [vmem:[%s1 + $0x8] sm:$0xff]
    %v22 = vld [vmem:[%s1 + $0x10] sm:$0xff]
    %v23 = vld [vmem:[%s1 + $0x18] sm:$0xff]
    %v24 = vld [vmem:[%s1 + $0x20] sm:$0xff]
    %v25 = vld [vmem:[%s1 + $0x28] sm:$0xff]
    %v26 = vld [vmem:[%s1 + $0x30] sm:$0xff]
    %v27 = vld [vmem:[%s1 + $0x38] sm:$0xff]
    %v28 = vld [vmem:[%s1 + $0x40] sm:$0xff]
    %v29 = vld [vmem:[%s1 + $0x48] sm:$0xff]
    %v30 = vld [vmem:[%s1 + $0x50] sm:$0xff]
    %v31 = vld [vmem:[%s1 + $0x58] sm:$0xff]
    %v32 = vld [vmem:[%s1 + $0x60] sm:$0xff]
    %v33 = vld [vmem:[%s1 + $0x68] sm:$0xff]
    %v34 = vld [vmem:[%s1 + $0x70] sm:$0xff]
    %v35 = vld [vmem:[%s1 + $0x78] sm:$0xff]
    %v36 = vld [vmem:[%s2] sm:$0xff]
    %v37 = vld [vmem:[%s2 + $0x8] sm:$0xff]
    %v38 = vld [vmem:[%s2 + $0x10] sm:$0xff]
    %v39 = vld [vmem:[%s2 + $0x18] sm:$0xff]
    %v40 = vld [vmem:[%s3] sm:$0x1]
    %v41 = vlaneseq
    %v42 = vand.u32 %v41, 127
    %43 = vset.pattern.permute.xlu0 0
    %44 = vperm.xlu0 %43, %v18
    %v45 = vpop.permute.xlu0 %44
    %46 = vset.pattern.permute.xlu0 0
    %47 = vperm.xlu0 %46, %v19
    %v48 = vpop.permute.xlu0 %47
    %vm49 = vcmp.eq.s32.totalorder %v42, %v45
    %vm50 = vcmp.eq.s32.totalorder %v42, %v48
    %v51 = vsel %vm49, 1, 0
    %v52 = vsel %vm50, 1, 0
    %v53 = vcvt.s32.f32 %v51
    %v54 = vcvt.s32.f32 %v52
    %55 = vmatpush.msra.mxu0 %v35
    %56 = vmatpush.msra.mxu0 %v34
    %57 = vmatpush.msra.mxu0 %v33
    %58 = vmatpush.msra.mxu0 %v32
    %59 = vmatpush.msra.mxu0 %v31
    %60 = vmatpush.msra.mxu0 %v30
    %61 = vmatpush.msra.mxu0 %v29
    %62 = vmatpush.msra.mxu0 %v28
    %63 = vmatpush.msra.mxu0 %v27
    %64 = vmatpush.msra.mxu0 %v26
    %65 = vmatpush.msra.mxu0 %v25
    %66 = vmatpush.msra.mxu0 %v24
    %67 = vmatpush.msra.mxu0 %v23
    %68 = vmatpush.msra.mxu0 %v22
    %69 = vmatpush.msra.mxu0 %v21
    %70 = vmatpush.msra.mxu0 %v20
    %71 = vmatmul.f32.gmra.mxu0 %v53
    %v72 = vpop.f32.mrf.mxu0
    %v73 = vadd.f32 0.0, %v72
    %74 = vmatmul.f32.gmra.mxu0 %v54
    %v75 = vpop.f32.mrf.mxu0
    %v76 = vadd.f32 0.0, %v75
    %77 = vdwg.mxu0
    %v79 = vperm.slane %v40, 0
    %vm81 = vcmask 261120
    %v83 = vsel %vm81, %v73, 0
    %v86 = vsel %vm81, %v76, 0
    %88 = vmatpush.msra.mxu0 0.0
    %89 = vmatpush.msra.mxu0 0.0
    %90 = vmatpush.msra.mxu0 0.0
    %91 = vmatpush.msra.mxu0 0.0
    %92 = vmatpush.msra.mxu0 0.0
    %93 = vmatpush.msra.mxu0 0.0
    %94 = vmatpush.msra.mxu0 0.0
    %95 = vmatpush.msra.mxu0 0.0
    %96 = vmatpush.msra.mxu0 0.0
    %97 = vmatpush.msra.mxu0 0.0
    %98 = vmatpush.msra.mxu0 0.0
    %99 = vmatpush.msra.mxu0 0.0
    %100 = vmatpush.msra.mxu0 %v39
    %101 = vmatpush.msra.mxu0 %v38
    %102 = vmatpush.msra.mxu0 %v37
    %103 = vmatpush.msra.mxu0 %v36
    %104 = vmatmul.f32.gmra.mxu0 %v83
    %v105 = vpop.f32.mrf.mxu0
    %v106 = vadd.f32 %v79, %v105
    %107 = vmatmul.f32.gmra.mxu0 %v86
    %v108 = vpop.f32.mrf.mxu0
    %v109 = vadd.f32 %v79, %v108
    %110 = vdwg.mxu0
    %111 = vst [vmem:[#allocation2] sm:$0xff] %v106
    %112 = vst [vmem:[#allocation2 + $0x8] sm:$0xff] %v109
    // Predicated region
    $region18: #{tpu_custom_call.1} parent=1 // pred_check
      _
    $region19: #{tpu_custom_call.1} parent=1 // pred_check_branch
      %114 = sbr.rel (0) target = $region21
    $region20: #{tpu_custom_call.1} parent=1 // pred_region
      %116 = vsyncadd [#allocation3], 0
      %s117 = sshll.u32 [#allocation2], 4
      %s118 = int_to_ptr.vmem [resolvable:$true] %s117
      %s119 = sshll.u32 %s4, 4
      %s120 = int_to_ptr.hbm [resolvable:$true] %s119
      %125 = dma.vmem_to_hbm [thread:$0]  %s118, 256, %s120, [#allocation3], 128, 128, 8
    $region21: #{tpu_custom_call.1} parent=1 // pred_fallthru
      _
    // Predicated region
    $region22: #{tpu_custom_call.1} parent=1 // pred_check
      _
    $region23: #{tpu_custom_call.1} parent=1 // pred_check_branch
      %127 = sbr.rel (0) target = $region25
    $region24: #{tpu_custom_call.1} parent=1 // pred_region
      %129 = dma.done [#allocation3], 256
    $region25: #{tpu_custom_call.1} parent=1 // pred_fallthru
      _
    %130 = vsyncpa [#allocation3], 1

</llo_original>
